<compile_context>
chip_gen: v7x
topology: tpu7x:2x2x1
jax: 0.10.0
libtpu: 0.0.40
codegen_flags: <defaults>
</compile_context>

<pallas_src>
import functools

import jax
import jax.numpy as jnp
from jax.experimental import pallas as pl
from jax.experimental.pallas import tpu as pltpu


def _make_kernel(num_layers, tile_b, batch_valid, padded):
    """Pallas kernel for one [F, TILE_B] batch tile of the autoencoder."""
    n = num_layers

    def _cast(v, dtype):
        return v if v.dtype == dtype else v.astype(dtype)

    def kernel(*refs):
        # refs layout:
        #   refs[0]               : x_t tile        [F, TILE_B]
        #   refs[1 : 1+2n]        : encoder (W, b) pairs, W: [out, in], b: [out, 1]
        #   refs[1+2n : 1+4n]     : decoder (W, b) pairs (already in apply order)
        #   refs[1+4n : 1+4n+3]   : recon_t tile, bottleneck_t tile, sq-partials tile
        x_ref = refs[0]
        enc_refs = refs[1 : 1 + 2 * n]
        dec_refs = refs[1 + 2 * n : 1 + 4 * n]
        out_ref, bn_ref, sq_ref = refs[1 + 4 * n : 1 + 4 * n + 3]

        x0 = _cast(x_ref[...], jnp.float32)            # [F, TILE_B]

        def apply_layer(h, w_ref, b_ref):
            w = w_ref[...]                             # [out, in]
            acc = jnp.dot(w, _cast(h, w.dtype),        # MXU, f32 accumulate
                          preferred_element_type=jnp.float32)
            return jnp.maximum(acc + _cast(b_ref[...], jnp.float32), 0.0)

        # --- encoder ---
        h = x0
        for li in range(n):
            h = apply_layer(h, enc_refs[2 * li], enc_refs[2 * li + 1])
        bn_ref[...] = _cast(h, bn_ref.dtype)

        # --- decoder (already reversed, as in the module) ---
        for li in range(n):
            h = apply_layer(h, dec_refs[2 * li], dec_refs[2 * li + 1])
        out_ref[...] = _cast(h, out_ref.dtype)

        # --- per-column partial sum of squared error (for MSE, mean reduction) ---
        diff = h - x0
        if padded:
            col = (jax.lax.broadcasted_iota(jnp.int32, (1, tile_b), 1)
                   + pl.program_id(0) * tile_b)
            diff = jnp.where(col < batch_valid, diff, 0.0)
        sq_ref[...] = jnp.sum(diff * diff, axis=0, keepdims=True)  # [1, TILE_B]

    return kernel


def init_params(key, sizes):
    """torch.nn.Linear-style params stored as W: [out, in], b: [out, 1].

    Returns (enc_params, dec_params) with dec_params already in application
    order (reversed), matching `ModuleList(reversed(self._decoding_layers))`.
    """
    n = len(sizes) - 1
    enc_params, dec_unrev = [], []
    for i in range(n):
        f, t, a = sizes[i], sizes[i + 1], sizes[i]
        key, k1, k2, k3, k4 = jax.random.split(key, 5)
        be = 1.0 / (f ** 0.5)
        enc_params.append((
            jax.random.uniform(k1, (t, f), jnp.float32, -be, be),
            jax.random.uniform(k2, (t, 1), jnp.float32, -be, be)))
        bd = 1.0 / (t ** 0.5)
        dec_unrev.append((
            jax.random.uniform(k3, (a, t), jnp.float32, -bd, bd),
            jax.random.uniform(k4, (a, 1), jnp.float32, -bd, bd)))
    return enc_params, list(reversed(dec_unrev))


@functools.partial(jax.jit, static_argnames=("sizes", "tile_b"))
def autoencoder_forward(x, enc_flat, dec_flat, sizes, tile_b=512):
    """Full forward (encode -> decode -> MSE) in a single batch-tiled Pallas call.

    x: [B, F] (PyTorch layout).  Internally relaid out to [F, B] (batch on lanes);
    the edge transposes are pure layout plumbing outside the kernel.
    """
    n = len(sizes) - 1
    B, F = x.shape
    assert F == sizes[0]
    Fb = sizes[-1]

    num_tiles = (B + tile_b - 1) // tile_b
    Bp = num_tiles * tile_b
    padded = Bp != B

    x_t = x.T                                           # [F, B] batch-on-lanes
    if padded:
        x_t = jnp.pad(x_t, ((0, 0), (0, Bp - B)))

    params = tuple(enc_flat) + tuple(dec_flat)
    act_dtype = x.dtype
    kernel = _make_kernel(n, tile_b, B, padded)

    out_shapes = (
        jax.ShapeDtypeStruct((F, Bp), act_dtype),       # reconstruction (transposed)
        jax.ShapeDtypeStruct((Fb, Bp), act_dtype),      # bottleneck (transposed)
        jax.ShapeDtypeStruct((1, Bp), jnp.float32),     # per-column sum-of-squares
    )

    x_spec = pl.BlockSpec((F, tile_b), lambda i: (0, i))
    param_specs = [pl.BlockSpec(p.shape, lambda i: (0, 0)) for p in params]
    out_specs = (
        pl.BlockSpec((F, tile_b), lambda i: (0, i)),
        pl.BlockSpec((Fb, tile_b), lambda i: (0, i)),
        pl.BlockSpec((1, tile_b), lambda i: (0, i)),
    )

    act_bytes = jnp.dtype(act_dtype).itemsize
    flops = int(2 * Bp * sum(int(p.size) for p in params[0::2]))
    bytes_accessed = int(
        F * Bp * act_bytes            # x_t in
        + F * Bp * act_bytes          # reconstruction out
        + Fb * Bp * act_bytes         # bottleneck out
        + Bp * 4                      # loss partials out
        + sum(int(p.size) * p.dtype.itemsize for p in params))

    recon_t, bn_t, sq_cols = pl.pallas_call(
        kernel,
        grid=(num_tiles,),
        in_specs=[x_spec] + param_specs,
        out_specs=out_specs,
        out_shape=out_shapes,
        compiler_params=pltpu.CompilerParams(
            dimension_semantics=("parallel",)),
        cost_estimate=pl.CostEstimate(
            flops=flops, transcendentals=0, bytes_accessed=bytes_accessed),
    )(x_t, *params)

    recon = recon_t[:, :B].T
    bottleneck = bn_t[:, :B].T
    loss = jnp.sum(sq_cols) / (B * F)                   # MSE, reduction='mean'
    return recon, bottleneck, loss


if __name__ == "__main__":
    sizes = (32, 16, 8)      # bottleneck autoencoder: 32 -> 16 -> 8 -> 16 -> 32
    batch = 200              # deliberately not a multiple of tile_b: exercises masking
    tile_b = 128             # -> grid of 2 tiles, second tile partially valid

    key = jax.random.PRNGKey(0)
    key, kx = jax.random.split(key)
    x = jax.random.normal(kx, (batch, sizes[0]), jnp.float32)

    enc_params, dec_params = init_params(key, sizes)
    enc_flat = tuple(t for pair in enc_params for t in pair)
    dec_flat = tuple(t for pair in dec_params for t in pair)

    recon, bottleneck, loss = autoencoder_forward(
        x, enc_flat, dec_flat, sizes, tile_b=tile_b)
    jax.block_until_ready((recon, bottleneck, loss))

    # Pure-JAX reference of the same math (W is [out,in], b is [out,1]).
    h = x
    for w, b in enc_params:
        h = jnp.maximum(h @ w.T + b[:, 0], 0.0)
    bn_expected = h
    for w, b in dec_params:
        h = jnp.maximum(h @ w.T + b[:, 0], 0.0)
    loss_expected = jnp.mean((h - x) ** 2)

    assert recon.shape == (batch, sizes[0])
    assert bottleneck.shape == (batch, sizes[-1])
    assert jnp.allclose(recon, h, atol=1e-5, rtol=1e-5)
    assert jnp.allclose(bottleneck, bn_expected, atol=1e-5, rtol=1e-5)
    assert jnp.allclose(loss, loss_expected, atol=1e-5, rtol=1e-5)

    # bf16 I/O path (memory-bound lever for large batches on v6e/v7x): f32 accumulate
    # inside the kernel, loose check only (bf16 rounding of inputs/weights).
    xb = x.astype(jnp.bfloat16)
    encb = tuple(t.astype(jnp.bfloat16) for t in enc_flat)
    decb = tuple(t.astype(jnp.bfloat16) for t in dec_flat)
    rb, bb, lb = autoencoder_forward(xb, encb, decb, sizes, tile_b=tile_b)
    jax.block_until_ready((rb, bb, lb))
    assert rb.shape == (batch, sizes[0]) and rb.dtype == jnp.bfloat16
    assert bb.shape == (batch, sizes[-1]) and bb.dtype == jnp.bfloat16
    assert bool(jnp.isfinite(lb))
    assert jnp.allclose(lb, loss_expected, rtol=0.2, atol=0.05)

    print("KERNEL_OK")
</pallas_src>

<mosaic_0001>
module attributes {stable_mosaic.version = 11 : i64} {
  func.func @kernel(%arg0: i32, %arg1: memref<32x128xf32, #tpu.memory_space<vmem>>, %arg2: memref<16x32xf32, #tpu.memory_space<vmem>>, %arg3: memref<16x1xf32, #tpu.memory_space<vmem>>, %arg4: memref<8x16xf32, #tpu.memory_space<vmem>>, %arg5: memref<8x1xf32, #tpu.memory_space<vmem>>, %arg6: memref<16x8xf32, #tpu.memory_space<vmem>>, %arg7: memref<16x1xf32, #tpu.memory_space<vmem>>, %arg8: memref<32x16xf32, #tpu.memory_space<vmem>>, %arg9: memref<32x1xf32, #tpu.memory_space<vmem>>, %arg10: memref<32x128xf32, #tpu.memory_space<vmem>>, %arg11: memref<8x128xf32, #tpu.memory_space<vmem>>, %arg12: memref<1x128xf32, #tpu.memory_space<vmem>>) attributes {dimension_semantics = [#tpu.dimension_semantics<parallel>], iteration_bounds = array<i64: 2>, scalar_prefetch = 0 : i64, scratch_operands = 0 : i64, tpu.core_type = #tpu.core_type<tc>, window_params = [{transform_indices = @transform_0, window_bounds = array<i64: 32, 128>}, {pipeline_mode = #tpu.pipeline_mode<synchronous>, transform_indices = @transform_1, window_bounds = array<i64: 16, 32>}, {pipeline_mode = #tpu.pipeline_mode<synchronous>, transform_indices = @transform_2, window_bounds = array<i64: 16, 1>}, {pipeline_mode = #tpu.pipeline_mode<synchronous>, transform_indices = @transform_3, window_bounds = array<i64: 8, 16>}, {pipeline_mode = #tpu.pipeline_mode<synchronous>, transform_indices = @transform_4, window_bounds = array<i64: 8, 1>}, {pipeline_mode = #tpu.pipeline_mode<synchronous>, transform_indices = @transform_5, window_bounds = array<i64: 16, 8>}, {pipeline_mode = #tpu.pipeline_mode<synchronous>, transform_indices = @transform_6, window_bounds = array<i64: 16, 1>}, {pipeline_mode = #tpu.pipeline_mode<synchronous>, transform_indices = @transform_7, window_bounds = array<i64: 32, 16>}, {pipeline_mode = #tpu.pipeline_mode<synchronous>, transform_indices = @transform_8, window_bounds = array<i64: 32, 1>}, {transform_indices = @transform_9, window_bounds = array<i64: 32, 128>}, {transform_indices = @transform_10, window_bounds = array<i64: 8, 128>}, {transform_indices = @transform_11, window_bounds = array<i64: 1, 128>}]} {
    %c0 = arith.constant 0 : index
    %c0_0 = arith.constant 0 : index
    %0 = vector.load %arg1[%c0, %c0_0] : memref<32x128xf32, #tpu.memory_space<vmem>>, vector<32x128xf32>
    %c0_1 = arith.constant 0 : index
    %c0_2 = arith.constant 0 : index
    %1 = vector.load %arg2[%c0_1, %c0_2] : memref<16x32xf32, #tpu.memory_space<vmem>>, vector<16x32xf32>
    %cst = arith.constant dense<0.000000e+00> : vector<16x128xf32>
    %2 = tpu.matmul %1, %0, %cst {dimension_numbers = #tpu.dot_dimension_numbers<[1], [0], [0], [1], [0, 0, 1, 1], [], []>} : vector<16x32xf32>, vector<32x128xf32>, vector<16x128xf32> -> vector<16x128xf32>
    %c0_3 = arith.constant 0 : index
    %c0_4 = arith.constant 0 : index
    %3 = vector.load %arg3[%c0_3, %c0_4] : memref<16x1xf32, #tpu.memory_space<vmem>>, vector<16x1xf32>
    %4 = vector.broadcast %3 : vector<16x1xf32> to vector<16x128xf32>
    %5 = arith.addf %2, %4 : vector<16x128xf32>
    %cst_5 = arith.constant 0.000000e+00 : f32
    %6 = vector.broadcast %cst_5 : f32 to vector<16x128xf32>
    %7 = arith.maximumf %5, %6 : vector<16x128xf32>
    %c0_6 = arith.constant 0 : index
    %c0_7 = arith.constant 0 : index
    %8 = vector.load %arg4[%c0_6, %c0_7] : memref<8x16xf32, #tpu.memory_space<vmem>>, vector<8x16xf32>
    %cst_8 = arith.constant dense<0.000000e+00> : vector<8x128xf32>
    %9 = tpu.matmul %8, %7, %cst_8 {dimension_numbers = #tpu.dot_dimension_numbers<[1], [0], [0], [1], [0, 0, 1, 1], [], []>} : vector<8x16xf32>, vector<16x128xf32>, vector<8x128xf32> -> vector<8x128xf32>
    %c0_9 = arith.constant 0 : index
    %c0_10 = arith.constant 0 : index
    %10 = vector.load %arg5[%c0_9, %c0_10] : memref<8x1xf32, #tpu.memory_space<vmem>>, vector<8x1xf32>
    %11 = vector.broadcast %10 : vector<8x1xf32> to vector<8x128xf32>
    %12 = arith.addf %9, %11 : vector<8x128xf32>
    %cst_11 = arith.constant 0.000000e+00 : f32
    %13 = vector.broadcast %cst_11 : f32 to vector<8x128xf32>
    %14 = arith.maximumf %12, %13 : vector<8x128xf32>
    %c0_12 = arith.constant 0 : index
    %c0_13 = arith.constant 0 : index
    %15 = vector.load %arg11[%c0_12, %c0_13] : memref<8x128xf32, #tpu.memory_space<vmem>>, vector<8x128xf32>
    tpu.vector_store %arg11[%c0_12, %c0_13], %14 {strides = array<i32>} : memref<8x128xf32, #tpu.memory_space<vmem>>, vector<8x128xf32>,
    %c0_14 = arith.constant 0 : index
    %c0_15 = arith.constant 0 : index
    %16 = vector.load %arg6[%c0_14, %c0_15] : memref<16x8xf32, #tpu.memory_space<vmem>>, vector<16x8xf32>
    %cst_16 = arith.constant dense<0.000000e+00> : vector<16x128xf32>
    %17 = tpu.matmul %16, %14, %cst_16 {dimension_numbers = #tpu.dot_dimension_numbers<[1], [0], [0], [1], [0, 0, 1, 1], [], []>} : vector<16x8xf32>, vector<8x128xf32>, vector<16x128xf32> -> vector<16x128xf32>
    %c0_17 = arith.constant 0 : index
    %c0_18 = arith.constant 0 : index
    %18 = vector.load %arg7[%c0_17, %c0_18] : memref<16x1xf32, #tpu.memory_space<vmem>>, vector<16x1xf32>
    %19 = vector.broadcast %18 : vector<16x1xf32> to vector<16x128xf32>
    %20 = arith.addf %17, %19 : vector<16x128xf32>
    %cst_19 = arith.constant 0.000000e+00 : f32
    %21 = vector.broadcast %cst_19 : f32 to vector<16x128xf32>
    %22 = arith.maximumf %20, %21 : vector<16x128xf32>
    %c0_20 = arith.constant 0 : index
    %c0_21 = arith.constant 0 : index
    %23 = vector.load %arg8[%c0_20, %c0_21] : memref<32x16xf32, #tpu.memory_space<vmem>>, vector<32x16xf32>
    %cst_22 = arith.constant dense<0.000000e+00> : vector<32x128xf32>
    %24 = tpu.matmul %23, %22, %cst_22 {dimension_numbers = #tpu.dot_dimension_numbers<[1], [0], [0], [1], [0, 0, 1, 1], [], []>} : vector<32x16xf32>, vector<16x128xf32>, vector<32x128xf32> -> vector<32x128xf32>
    %c0_23 = arith.constant 0 : index
    %c0_24 = arith.constant 0 : index
    %25 = vector.load %arg9[%c0_23, %c0_24] : memref<32x1xf32, #tpu.memory_space<vmem>>, vector<32x1xf32>
    %26 = vector.broadcast %25 : vector<32x1xf32> to vector<32x128xf32>
    %27 = arith.addf %24, %26 : vector<32x128xf32>
    %cst_25 = arith.constant 0.000000e+00 : f32
    %28 = vector.broadcast %cst_25 : f32 to vector<32x128xf32>
    %29 = arith.maximumf %27, %28 : vector<32x128xf32>
    %c0_26 = arith.constant 0 : index
    %c0_27 = arith.constant 0 : index
    %30 = vector.load %arg10[%c0_26, %c0_27] : memref<32x128xf32, #tpu.memory_space<vmem>>, vector<32x128xf32>
    tpu.vector_store %arg10[%c0_26, %c0_27], %29 {strides = array<i32>} : memref<32x128xf32, #tpu.memory_space<vmem>>, vector<32x128xf32>,
    %31 = arith.subf %29, %0 : vector<32x128xf32>
    %32 = tpu.iota {dimensions = array<i32: 1>} : vector<1x128xi32>
    %c128_i32 = arith.constant 128 : i32
    %33 = arith.muli %arg0, %c128_i32 : i32
    %34 = vector.broadcast %33 : i32 to vector<1x128xi32>
    %35 = arith.addi %32, %34 : vector<1x128xi32>
    %c200_i32 = arith.constant 200 : i32
    %36 = vector.broadcast %c200_i32 : i32 to vector<1x128xi32>
    %37 = arith.cmpi slt, %35, %36 : vector<1x128xi32>
    %cst_28 = arith.constant 0.000000e+00 : f32
    %38 = vector.shape_cast %37 : vector<1x128xi1> to vector<1x128xi1>
    %39 = vector.broadcast %38 : vector<1x128xi1> to vector<32x128xi1>
    %40 = vector.broadcast %cst_28 : f32 to vector<32x128xf32>
    %41 = arith.select %39, %31, %40 : vector<32x128xi1>, vector<32x128xf32>
    %42 = arith.mulf %41, %41 : vector<32x128xf32>
    %cst_29 = arith.constant dense<0.000000e+00> : vector<128xf32>
    %43 = vector.multi_reduction <add>, %42, %cst_29 [0] : vector<32x128xf32> to vector<128xf32>
    %44 = vector.shape_cast %43 : vector<128xf32> to vector<1x128xf32>
    %c0_30 = arith.constant 0 : index
    %c0_31 = arith.constant 0 : index
    %45 = vector.load %arg12[%c0_30, %c0_31] : memref<1x128xf32, #tpu.memory_space<vmem>>, vector<1x128xf32>
    tpu.vector_store %arg12[%c0_30, %c0_31], %44 {strides = array<i32>} : memref<1x128xf32, #tpu.memory_space<vmem>>, vector<1x128xf32>,
    return
  }
  func.func @transform_0(%arg0: i32) -> (i32, i32) {
    %c0_i32 = arith.constant 0 : i32
    %c0_i32_0 = arith.constant 0 : i32
    return %c0_i32, %arg0 : i32, i32
  }
  func.func @transform_1(%arg0: i32) -> (i32, i32) {
    %c0_i32 = arith.constant 0 : i32
    %c0_i32_0 = arith.constant 0 : i32
    %c0_i32_1 = arith.constant 0 : i32
    return %c0_i32, %c0_i32_0 : i32, i32
  }
  func.func @transform_2(%arg0: i32) -> (i32, i32) {
    %c0_i32 = arith.constant 0 : i32
    %c0_i32_0 = arith.constant 0 : i32
    %c0_i32_1 = arith.constant 0 : i32
    return %c0_i32, %c0_i32_0 : i32, i32
  }
  func.func @transform_3(%arg0: i32) -> (i32, i32) {
    %c0_i32 = arith.constant 0 : i32
    %c0_i32_0 = arith.constant 0 : i32
    %c0_i32_1 = arith.constant 0 : i32
    return %c0_i32, %c0_i32_0 : i32, i32
  }
  func.func @transform_4(%arg0: i32) -> (i32, i32) {
    %c0_i32 = arith.constant 0 : i32
    %c0_i32_0 = arith.constant 0 : i32
    %c0_i32_1 = arith.constant 0 : i32
    return %c0_i32, %c0_i32_0 : i32, i32
  }
  func.func @transform_5(%arg0: i32) -> (i32, i32) {
    %c0_i32 = arith.constant 0 : i32
    %c0_i32_0 = arith.constant 0 : i32
    %c0_i32_1 = arith.constant 0 : i32
    return %c0_i32, %c0_i32_0 : i32, i32
  }
  func.func @transform_6(%arg0: i32) -> (i32, i32) {
    %c0_i32 = arith.constant 0 : i32
    %c0_i32_0 = arith.constant 0 : i32
    %c0_i32_1 = arith.constant 0 : i32
    return %c0_i32, %c0_i32_0 : i32, i32
  }
  func.func @transform_7(%arg0: i32) -> (i32, i32) {
    %c0_i32 = arith.constant 0 : i32
    %c0_i32_0 = arith.constant 0 : i32
    %c0_i32_1 = arith.constant 0 : i32
    return %c0_i32, %c0_i32_0 : i32, i32
  }
  func.func @transform_8(%arg0: i32) -> (i32, i32) {
    %c0_i32 = arith.constant 0 : i32
    %c0_i32_0 = arith.constant 0 : i32
    %c0_i32_1 = arith.constant 0 : i32
    return %c0_i32, %c0_i32_0 : i32, i32
  }
  func.func @transform_9(%arg0: i32) -> (i32, i32) {
    %c0_i32 = arith.constant 0 : i32
    %c0_i32_0 = arith.constant 0 : i32
    return %c0_i32, %arg0 : i32, i32
  }
  func.func @transform_10(%arg0: i32) -> (i32, i32) {
    %c0_i32 = arith.constant 0 : i32
    %c0_i32_0 = arith.constant 0 : i32
    return %c0_i32, %arg0 : i32, i32
  }
  func.func @transform_11(%arg0: i32) -> (i32, i32) {
    %c0_i32 = arith.constant 0 : i32
    %c0_i32_0 = arith.constant 0 : i32
    return %c0_i32, %arg0 : i32, i32
  }
}

</mosaic_0001>

<llo_original>
// kernel: autoencoder_forward.1
$region0: #{autoencoder_forward.1}
  #allocation0 [shape = 'u32[]', space=smem, size = 0x4, offset = 0x4, fixed_abs, tag = 'smem constant byte address 0x4 - core index']
  #allocation1 [shape = 'u32[144,128]{1,0:T(1,128)}', space=vmem, size = 0x12000, scoped, tag = 'internal scratch']
  %s0 = inlined_call_operand.vmem [shape: f32[32,256], index: 0, kind: input, shape index: {}]
  %s1 = inlined_call_operand.vmem [shape: f32[16,32], index: 1, kind: input, shape index: {}]
  %s2 = inlined_call_operand.vmem [shape: f32[16,1], index: 2, kind: input, shape index: {}]
  %s3 = inlined_call_operand.vmem [shape: f32[8,16], index: 3, kind: input, shape index: {}]
  %s4 = inlined_call_operand.vmem [shape: f32[8,1], index: 4, kind: input, shape index: {}]
  %s5 = inlined_call_operand.vmem [shape: f32[16,8], index: 5, kind: input, shape index: {}]
  %s6 = inlined_call_operand.vmem [shape: f32[16,1], index: 6, kind: input, shape index: {}]
  %s7 = inlined_call_operand.vmem [shape: f32[32,16], index: 7, kind: input, shape index: {}]
  %s8 = inlined_call_operand.vmem [shape: f32[32,1], index: 8, kind: input, shape index: {}]
  %s9 = inlined_call_operand.vmem [shape: f32[32,256], index: 9, kind: output, shape index: {0}]
  %s10 = inlined_call_operand.vmem [shape: f32[8,256], index: 10, kind: output, shape index: {1}]
  %s11 = inlined_call_operand.vmem [shape: f32[1,256], index: 11, kind: output, shape index: {2}]
  %12 = xla_tuple %s9, %s10, %s11
  %s13 = sld [smem:[#allocation0]]
  $region157: #{autoencoder_forward.1} parent=0
    _
  %s15 = ssub.s32 1, %s13
  %s16 = scalar_select 0, %s15, %s13
  $region1: #{autoencoder_forward.1} parent=0
    #allocation2 [shape = 'u8[32768]{0}', space=vmem, size = 0x8000, scoped, tag = 'input window, operand 0']
    #allocation3 [shape = 'u8[32768]{0}', space=vmem, size = 0x8000, scoped, tag = 'output window, operand 0']
    loop: start=0, step=1, limit=4
    $region2: #{autoencoder_forward.1} parent=1 // loop_pre_header
      _
    $region3: #{autoencoder_forward.1} parent=1 // loop_header
      %s18 = sphi 0, %s22
      %p19 = scmp.ge.s32.totalorder %s18, 4
      %s28 = sphi 0, %s30
      %s31 = sphi 0, %s28
      %s32 = sphi 0, %s31
      %s48 = sphi 0, %s32
      %s52 = sphi 0, %s52
      %s54 = sphi 0, %s52
      %s55 = sphi 0, %s54
      %s69 = sphi 0, %s55
      %s73 = sphi 0, %s73
      %s75 = sphi 0, %s73
      %s76 = sphi 0, %s75
      %s90 = sphi 0, %s76
      %s94 = sphi 0, %s94
      %s96 = sphi 0, %s94
      %s97 = sphi 0, %s96
      %s111 = sphi 0, %s97
      %s115 = sphi 0, %s115
      %s117 = sphi 0, %s115
      %s118 = sphi 0, %s117
      %s132 = sphi 0, %s118
      %s136 = sphi 0, %s136
      %s138 = sphi 0, %s136
      %s139 = sphi 0, %s138
      %s153 = sphi 0, %s139
      %s157 = sphi 0, %s157
      %s159 = sphi 0, %s157
      %s160 = sphi 0, %s159
      %s174 = sphi 0, %s160
      %s178 = sphi 0, %s178
      %s180 = sphi 0, %s178
      %s181 = sphi 0, %s180
      %s195 = sphi 0, %s181
      %s199 = sphi 0, %s199
      %s201 = sphi 0, %s199
      %s202 = sphi 0, %s201
      %s216 = sphi 0, %s202
      %s222 = sphi 0, %s224
      %s225 = sphi 0, %s222
      %s226 = sphi 0, %s225
      %s242 = sphi 0, %s226
      %s248 = sphi 0, %s250
      %s251 = sphi 0, %s248
      %s252 = sphi 0, %s251
      %s268 = sphi 0, %s252
      %s274 = sphi 0, %s276
      %s277 = sphi 0, %s274
      %s278 = sphi 0, %s277
      %s294 = sphi 0, %s278
    $region4: #{autoencoder_forward.1} parent=1 // loop_header_branch
      %21 = sbr.rel (%p19) target = $region8
    $region5: #{autoencoder_forward.1} parent=1 // loop_body
      %s23 = ssub.s32 %s18, 1
      %s24 = ssub.s32 %s18, 2
      %s25 = sadd.s32 %s18, 1
      %s26 = ssub.s32 %s18, %s25
      %p27 = scmp.eq.s32.totalorder %s26, 0
      %s29 = sadd.s32 %s28, 1
      %s30 = scalar_select %p27, %s28, %s29
      %p33 = pneg %p27
      %p34 = scmp.eq.s32.totalorder %s18, 1
      %p35 = por %p33, %p34
      %p36 = scmp.ne.s32.totalorder %s28, %s31
      %p37 = scmp.eq.s32.totalorder %s18, 0
      %p38 = por %p36, %p37
      %p39 = scmp.ne.s32.totalorder %s28, %s31
      %p40 = scmp.eq.s32.totalorder %s23, 1
      %p41 = por %p39, %p40
      %p42 = scmp.ne.s32.totalorder %s31, %s32
      %p43 = scmp.eq.s32.totalorder %s23, 0
      %p44 = por %p42, %p43
      %p45 = scmp.ne.s32.totalorder %s31, %s32
      %p46 = scmp.eq.s32.totalorder %s24, 1
      %p47 = por %p45, %p46
      %p49 = scmp.ne.s32.totalorder %s32, %s48
      %p50 = scmp.eq.s32.totalorder %s24, 0
      %p51 = por %p49, %p50
      %s53 = sadd.s32 %s52, 1
      %p56 = scmp.eq.s32.totalorder %s18, 1
      %p57 = scmp.ne.s32.totalorder %s52, %s54
      %p58 = scmp.eq.s32.totalorder %s18, 0
      %p59 = por %p57, %p58
      %p60 = scmp.ne.s32.totalorder %s52, %s54
      %p61 = scmp.eq.s32.totalorder %s23, 1
      %p62 = por %p60, %p61
      %p63 = scmp.ne.s32.totalorder %s54, %s55
      %p64 = scmp.eq.s32.totalorder %s23, 0
      %p65 = por %p63, %p64
      %p66 = scmp.ne.s32.totalorder %s54, %s55
      %p67 = scmp.eq.s32.totalorder %s24, 1
      %p68 = por %p66, %p67
      %p70 = scmp.ne.s32.totalorder %s55, %s69
      %p71 = scmp.eq.s32.totalorder %s24, 0
      %p72 = por %p70, %p71
      %s74 = sadd.s32 %s73, 1
      %p77 = scmp.eq.s32.totalorder %s18, 1
      %p78 = scmp.ne.s32.totalorder %s73, %s75
      %p79 = scmp.eq.s32.totalorder %s18, 0
      %p80 = por %p78, %p79
      %p81 = scmp.ne.s32.totalorder %s73, %s75
      %p82 = scmp.eq.s32.totalorder %s23, 1
      %p83 = por %p81, %p82
      %p84 = scmp.ne.s32.totalorder %s75, %s76
      %p85 = scmp.eq.s32.totalorder %s23, 0
      %p86 = por %p84, %p85
      %p87 = scmp.ne.s32.totalorder %s75, %s76
      %p88 = scmp.eq.s32.totalorder %s24, 1
      %p89 = por %p87, %p88
      %p91 = scmp.ne.s32.totalorder %s76, %s90
      %p92 = scmp.eq.s32.totalorder %s24, 0
      %p93 = por %p91, %p92
      %s95 = sadd.s32 %s94, 1
      %p98 = scmp.eq.s32.totalorder %s18, 1
      %p99 = scmp.ne.s32.totalorder %s94, %s96
      %p100 = scmp.eq.s32.totalorder %s18, 0
      %p101 = por %p99, %p100
      %p102 = scmp.ne.s32.totalorder %s94, %s96
      %p103 = scmp.eq.s32.totalorder %s23, 1
      %p104 = por %p102, %p103
      %p105 = scmp.ne.s32.totalorder %s96, %s97
      %p106 = scmp.eq.s32.totalorder %s23, 0
      %p107 = por %p105, %p106
      %p108 = scmp.ne.s32.totalorder %s96, %s97
      %p109 = scmp.eq.s32.totalorder %s24, 1
      %p110 = por %p108, %p109
      %p112 = scmp.ne.s32.totalorder %s97, %s111
      %p113 = scmp.eq.s32.totalorder %s24, 0
      %p114 = por %p112, %p113
      %s116 = sadd.s32 %s115, 1
      %p119 = scmp.eq.s32.totalorder %s18, 1
      %p120 = scmp.ne.s32.totalorder %s115, %s117
      %p121 = scmp.eq.s32.totalorder %s18, 0
      %p122 = por %p120, %p121
      %p123 = scmp.ne.s32.totalorder %s115, %s117
      %p124 = scmp.eq.s32.totalorder %s23, 1
      %p125 = por %p123, %p124
      %p126 = scmp.ne.s32.totalorder %s117, %s118
      %p127 = scmp.eq.s32.totalorder %s23, 0
      %p128 = por %p126, %p127
      %p129 = scmp.ne.s32.totalorder %s117, %s118
      %p130 = scmp.eq.s32.totalorder %s24, 1
      %p131 = por %p129, %p130
      %p133 = scmp.ne.s32.totalorder %s118, %s132
      %p134 = scmp.eq.s32.totalorder %s24, 0
      %p135 = por %p133, %p134
      %s137 = sadd.s32 %s136, 1
      %p140 = scmp.eq.s32.totalorder %s18, 1
      %p141 = scmp.ne.s32.totalorder %s136, %s138
      %p142 = scmp.eq.s32.totalorder %s18, 0
      %p143 = por %p141, %p142
      %p144 = scmp.ne.s32.totalorder %s136, %s138
      %p145 = scmp.eq.s32.totalorder %s23, 1
      %p146 = por %p144, %p145
      %p147 = scmp.ne.s32.totalorder %s138, %s139
      %p148 = scmp.eq.s32.totalorder %s23, 0
      %p149 = por %p147, %p148
      %p150 = scmp.ne.s32.totalorder %s138, %s139
      %p151 = scmp.eq.s32.totalorder %s24, 1
      %p152 = por %p150, %p151
      %p154 = scmp.ne.s32.totalorder %s139, %s153
      %p155 = scmp.eq.s32.totalorder %s24, 0
      %p156 = por %p154, %p155
      %s158 = sadd.s32 %s157, 1
      %p161 = scmp.eq.s32.totalorder %s18, 1
      %p162 = scmp.ne.s32.totalorder %s157, %s159
      %p163 = scmp.eq.s32.totalorder %s18, 0
      %p164 = por %p162, %p163
      %p165 = scmp.ne.s32.totalorder %s157, %s159
      %p166 = scmp.eq.s32.totalorder %s23, 1
      %p167 = por %p165, %p166
      %p168 = scmp.ne.s32.totalorder %s159, %s160
      %p169 = scmp.eq.s32.totalorder %s23, 0
      %p170 = por %p168, %p169
      %p171 = scmp.ne.s32.totalorder %s159, %s160
      %p172 = scmp.eq.s32.totalorder %s24, 1
      %p173 = por %p171, %p172
      %p175 = scmp.ne.s32.totalorder %s160, %s174
      %p176 = scmp.eq.s32.totalorder %s24, 0
      %p177 = por %p175, %p176
      %s179 = sadd.s32 %s178, 1
      %p182 = scmp.eq.s32.totalorder %s18, 1
      %p183 = scmp.ne.s32.totalorder %s178, %s180
      %p184 = scmp.eq.s32.totalorder %s18, 0
      %p185 = por %p183, %p184
      %p186 = scmp.ne.s32.totalorder %s178, %s180
      %p187 = scmp.eq.s32.totalorder %s23, 1
      %p188 = por %p186, %p187
      %p189 = scmp.ne.s32.totalorder %s180, %s181
      %p190 = scmp.eq.s32.totalorder %s23, 0
      %p191 = por %p189, %p190
      %p192 = scmp.ne.s32.totalorder %s180, %s181
      %p193 = scmp.eq.s32.totalorder %s24, 1
      %p194 = por %p192, %p193
      %p196 = scmp.ne.s32.totalorder %s181, %s195
      %p197 = scmp.eq.s32.totalorder %s24, 0
      %p198 = por %p196, %p197
      %s200 = sadd.s32 %s199, 1
      %p203 = scmp.eq.s32.totalorder %s18, 1
      %p204 = scmp.ne.s32.totalorder %s199, %s201
      %p205 = scmp.eq.s32.totalorder %s18, 0
      %p206 = por %p204, %p205
      %p207 = scmp.ne.s32.totalorder %s199, %s201
      %p208 = scmp.eq.s32.totalorder %s23, 1
      %p209 = por %p207, %p208
      %p210 = scmp.ne.s32.totalorder %s201, %s202
      %p211 = scmp.eq.s32.totalorder %s23, 0
      %p212 = por %p210, %p211
      %p213 = scmp.ne.s32.totalorder %s201, %s202
      %p214 = scmp.eq.s32.totalorder %s24, 1
      %p215 = por %p213, %p214
      %p217 = scmp.ne.s32.totalorder %s202, %s216
      %p218 = scmp.eq.s32.totalorder %s24, 0
      %p219 = por %p217, %p218
      %s220 = ssub.s32 %s18, %s25
      %p221 = scmp.eq.s32.totalorder %s220, 0
      %s223 = sadd.s32 %s222, 1
      %s224 = scalar_select %p221, %s222, %s223
      %p227 = pneg %p221
      %p228 = scmp.eq.s32.totalorder %s18, 1
      %p229 = por %p227, %p228
      %p230 = scmp.ne.s32.totalorder %s222, %s225
      %p231 = scmp.eq.s32.totalorder %s18, 0
      %p232 = por %p230, %p231
      %p233 = scmp.ne.s32.totalorder %s222, %s225
      %p234 = scmp.eq.s32.totalorder %s23, 1
      %p235 = por %p233, %p234
      %p236 = scmp.ne.s32.totalorder %s225, %s226
      %p237 = scmp.eq.s32.totalorder %s23, 0
      %p238 = por %p236, %p237
      %p239 = scmp.ne.s32.totalorder %s225, %s226
      %p240 = scmp.eq.s32.totalorder %s24, 1
      %p241 = por %p239, %p240
      %p243 = scmp.ne.s32.totalorder %s226, %s242
      %p244 = scmp.eq.s32.totalorder %s24, 0
      %p245 = por %p243, %p244
      %s246 = ssub.s32 %s18, %s25
      %p247 = scmp.eq.s32.totalorder %s246, 0
      %s249 = sadd.s32 %s248, 1
      %s250 = scalar_select %p247, %s248, %s249
      %p253 = pneg %p247
      %p254 = scmp.eq.s32.totalorder %s18, 1
      %p255 = por %p253, %p254
      %p256 = scmp.ne.s32.totalorder %s248, %s251
      %p257 = scmp.eq.s32.totalorder %s18, 0
      %p258 = por %p256, %p257
      %p259 = scmp.ne.s32.totalorder %s248, %s251
      %p260 = scmp.eq.s32.totalorder %s23, 1
      %p261 = por %p259, %p260
      %p262 = scmp.ne.s32.totalorder %s251, %s252
      %p263 = scmp.eq.s32.totalorder %s23, 0
      %p264 = por %p262, %p263
      %p265 = scmp.ne.s32.totalorder %s251, %s252
      %p266 = scmp.eq.s32.totalorder %s24, 1
      %p267 = por %p265, %p266
      %p269 = scmp.ne.s32.totalorder %s252, %s268
      %p270 = scmp.eq.s32.totalorder %s24, 0
      %p271 = por %p269, %p270
      %s272 = ssub.s32 %s18, %s25
      %p273 = scmp.eq.s32.totalorder %s272, 0
      %s275 = sadd.s32 %s274, 1
      %s276 = scalar_select %p273, %s274, %s275
      %p279 = pneg %p273
      %p280 = scmp.eq.s32.totalorder %s18, 1
      %p281 = por %p279, %p280
      %p282 = scmp.ne.s32.totalorder %s274, %s277
      %p283 = scmp.eq.s32.totalorder %s18, 0
      %p284 = por %p282, %p283
      %p285 = scmp.ne.s32.totalorder %s274, %s277
      %p286 = scmp.eq.s32.totalorder %s23, 1
      %p287 = por %p285, %p286
      %p288 = scmp.ne.s32.totalorder %s277, %s278
      %p289 = scmp.eq.s32.totalorder %s23, 0
      %p290 = por %p288, %p289
      %p291 = scmp.ne.s32.totalorder %s277, %s278
      %p292 = scmp.eq.s32.totalorder %s24, 1
      %p293 = por %p291, %p292
      %p295 = scmp.ne.s32.totalorder %s278, %s294
      %p296 = scmp.eq.s32.totalorder %s24, 0
      %p297 = por %p295, %p296
      %p298 = scmp.le.s32.totalorder 1, %s18
      %p299 = scmp.lt.s32.totalorder %s18, 3
      %p300 = pnand %p298, %p299
      %p301 = pneg %p300
      // Predicated region
      $region9: #{autoencoder_forward.1} parent=5 // pred_check
        _
      $region10: #{autoencoder_forward.1} parent=5 // pred_check_branch
        %303 = sbr.rel (%p300) target = $region12
      $region11: #{autoencoder_forward.1} parent=5 // pred_region
        %s304 = ssub.s32 %s18, 1
        // Predicated region
        $region13: #{autoencoder_forward.1} parent=11 // pred_check
          %p305 = pneg %p65
        $region14: #{autoencoder_forward.1} parent=11 // pred_check_branch
          %307 = sbr.rel (%p305) target = $region16
        $region15: #{autoencoder_forward.1} parent=11 // pred_region
          _
        $region16: #{autoencoder_forward.1} parent=11 // pred_fallthru
          _
        // Predicated region
        $region17: #{autoencoder_forward.1} parent=11 // pred_check
          %p308 = pneg %p86
        $region18: #{autoencoder_forward.1} parent=11 // pred_check_branch
          %310 = sbr.rel (%p308) target = $region20
        $region19: #{autoencoder_forward.1} parent=11 // pred_region
          _
        $region20: #{autoencoder_forward.1} parent=11 // pred_fallthru
          _
        // Predicated region
        $region21: #{autoencoder_forward.1} parent=11 // pred_check
          %p311 = pneg %p107
        $region22: #{autoencoder_forward.1} parent=11 // pred_check_branch
          %313 = sbr.rel (%p311) target = $region24
        $region23: #{autoencoder_forward.1} parent=11 // pred_region
          _
        $region24: #{autoencoder_forward.1} parent=11 // pred_fallthru
          _
        // Predicated region
        $region25: #{autoencoder_forward.1} parent=11 // pred_check
          %p314 = pneg %p128
        $region26: #{autoencoder_forward.1} parent=11 // pred_check_branch
          %316 = sbr.rel (%p314) target = $region28
        $region27: #{autoencoder_forward.1} parent=11 // pred_region
          _
        $region28: #{autoencoder_forward.1} parent=11 // pred_fallthru
          _
        // Predicated region
        $region29: #{autoencoder_forward.1} parent=11 // pred_check
          %p317 = pneg %p149
        $region30: #{autoencoder_forward.1} parent=11 // pred_check_branch
          %319 = sbr.rel (%p317) target = $region32
        $region31: #{autoencoder_forward.1} parent=11 // pred_region
          _
        $region32: #{autoencoder_forward.1} parent=11 // pred_fallthru
          _
        // Predicated region
        $region33: #{autoencoder_forward.1} parent=11 // pred_check
          %p320 = pneg %p170
        $region34: #{autoencoder_forward.1} parent=11 // pred_check_branch
          %322 = sbr.rel (%p320) target = $region36
        $region35: #{autoencoder_forward.1} parent=11 // pred_region
          _
        $region36: #{autoencoder_forward.1} parent=11 // pred_fallthru
          _
        // Predicated region
        $region37: #{autoencoder_forward.1} parent=11 // pred_check
          %p323 = pneg %p191
        $region38: #{autoencoder_forward.1} parent=11 // pred_check_branch
          %325 = sbr.rel (%p323) target = $region40
        $region39: #{autoencoder_forward.1} parent=11 // pred_region
          _
        $region40: #{autoencoder_forward.1} parent=11 // pred_fallthru
          _
        // Predicated region
        $region41: #{autoencoder_forward.1} parent=11 // pred_check
          %p326 = pneg %p212
        $region42: #{autoencoder_forward.1} parent=11 // pred_check_branch
          %328 = sbr.rel (%p326) target = $region44
        $region43: #{autoencoder_forward.1} parent=11 // pred_region
          _
        $region44: #{autoencoder_forward.1} parent=11 // pred_fallthru
          _
      $region12: #{autoencoder_forward.1} parent=5 // pred_fallthru
        _
      %p329 = scmp.lt.s32.totalorder %s18, 2
      // Predicated region
      $region45: #{autoencoder_forward.1} parent=5 // pred_check
        %p330 = pneg %p329
      $region46: #{autoencoder_forward.1} parent=5 // pred_check_branch
        %332 = sbr.rel (%p330) target = $region48
      $region47: #{autoencoder_forward.1} parent=5 // pred_region
        // Predicated region
        $region49: #{autoencoder_forward.1} parent=47 // pred_check
          %p333 = pneg %p38
        $region50: #{autoencoder_forward.1} parent=47 // pred_check_branch
          %335 = sbr.rel (%p333) target = $region52
        $region51: #{autoencoder_forward.1} parent=47 // pred_region
          %s336 = sand.u32 %s28, 1
          %s337 = sand.u32 %s28, 1
          %s338 = smul.addr %s337, 32
          %s339 = scalar_lea.vmem [#allocation2], %s338
          %s340 = smul.addr %s18, 8
          %s341 = scalar_lea.vmem %s0, %s340
          // Predicated region
          $region53: #{autoencoder_forward.1} parent=51 // pred_check
            _
          $region54: #{autoencoder_forward.1} parent=51 // pred_check_branch
            %343 = sbr.rel (0) target = $region56
          $region55: #{autoencoder_forward.1} parent=51 // pred_region
            // Predicated region
            $region57: #{autoencoder_forward.1} parent=55 // pred_check
              _
            $region58: #{autoencoder_forward.1} parent=55 // pred_check_branch
              %345 = sbr.rel (0) target = $region60
            $region59: #{autoencoder_forward.1} parent=55 // pred_region
              // Predicated region
              $region72: #{autoencoder_forward.1} parent=59 // pred_check
                _
              $region73: #{autoencoder_forward.1} parent=59 // pred_check_branch
                %366 = sbr.rel (0) target = $region75
              $region74: #{autoencoder_forward.1} parent=59 // pred_region
                loop: start=0, step=1, limit=1
                $region76: #{autoencoder_forward.1} parent=74 // loop_pre_header
                  _
                $region77: #{autoencoder_forward.1} parent=74 // loop_header
                  %s368 = sphi 0, %s372
                  %p369 = scmp.ge.s32.totalorder %s368, 1
                  %s373 = sphi %s341, %s341
                  %s374 = sphi %s339, %s339
                $region78: #{autoencoder_forward.1} parent=74 // loop_header_branch
                  %371 = sbr.rel (%p369) target = $region82
                $region79: #{autoencoder_forward.1} parent=74 // loop_body
                  %v375 = vld [vmem:[%s373] sm:$0xff]
                  %376 = vst [vmem:[%s374] sm:$0xff] %v375
                  %v377 = vld [vmem:[%s373 + $0x10] sm:$0xff]
                  %378 = vst [vmem:[%s374 + $0x8] sm:$0xff] %v377
                  %v379 = vld [vmem:[%s373 + $0x20] sm:$0xff]
                  %380 = vst [vmem:[%s374 + $0x10] sm:$0xff] %v379
                  %v381 = vld [vmem:[%s373 + $0x30] sm:$0xff]
                  %382 = vst [vmem:[%s374 + $0x18] sm:$0xff] %v381
                $region80: #{autoencoder_forward.1} parent=74 // loop_footer
                  %s372 = sadd.s32 1, %s368
                $region81: #{autoencoder_forward.1} parent=74 // loop_footer_branch
                  %367 = sbr.rel target = $region77
                $region82: #{autoencoder_forward.1} parent=74 // loop_exit
                  _
              $region75: #{autoencoder_forward.1} parent=59 // pred_fallthru
                _
              // Predicated region
              $region83: #{autoencoder_forward.1} parent=59 // pred_check
                _
              $region84: #{autoencoder_forward.1} parent=59 // pred_check_branch
                %384 = sbr.rel target = $region86
              $region85: #{autoencoder_forward.1} parent=59 // pred_region
                _
              $region86: #{autoencoder_forward.1} parent=59 // pred_fallthru
                _
            $region60: #{autoencoder_forward.1} parent=55 // pred_fallthru
              _
            // Predicated region
            $region61: #{autoencoder_forward.1} parent=55 // pred_check
              _
            $region62: #{autoencoder_forward.1} parent=55 // pred_check_branch
              %347 = sbr.rel target = $region64
            $region63: #{autoencoder_forward.1} parent=55 // pred_region
              loop: start=0, step=1, limit=1
              $region65: #{autoencoder_forward.1} parent=63 // loop_pre_header
                _
              $region66: #{autoencoder_forward.1} parent=63 // loop_header
                %s350 = sphi 0, %s354
                %p351 = scmp.ge.s32.totalorder %s350, 1
                %s355 = sphi %s341, %s341
                %s356 = sphi %s339, %s339
              $region67: #{autoencoder_forward.1} parent=63 // loop_header_branch
                %353 = sbr.rel (%p351) target = $region71
              $region68: #{autoencoder_forward.1} parent=63 // loop_body
                %v357 = vld [vmem:[%s355] sm:$0xff]
                %358 = vst [vmem:[%s356] sm:$0xff] %v357
                %v359 = vld [vmem:[%s355 + $0x10] sm:$0xff]
                %360 = vst [vmem:[%s356 + $0x8] sm:$0xff] %v359
                %v361 = vld [vmem:[%s355 + $0x20] sm:$0xff]
                %362 = vst [vmem:[%s356 + $0x10] sm:$0xff] %v361
                %v363 = vld [vmem:[%s355 + $0x30] sm:$0xff]
                %364 = vst [vmem:[%s356 + $0x18] sm:$0xff] %v363
              $region69: #{autoencoder_forward.1} parent=63 // loop_footer
                %s354 = sadd.s32 1, %s350
              $region70: #{autoencoder_forward.1} parent=63 // loop_footer_branch
                %349 = sbr.rel target = $region66
              $region71: #{autoencoder_forward.1} parent=63 // loop_exit
                _
            $region64: #{autoencoder_forward.1} parent=55 // pred_fallthru
              _
          $region56: #{autoencoder_forward.1} parent=51 // pred_fallthru
            _
          %385 = vnop
        $region52: #{autoencoder_forward.1} parent=47 // pred_fallthru
          _
      $region48: #{autoencoder_forward.1} parent=5 // pred_fallthru
        _
      %p386 = scmp.le.s32.totalorder 1, %s18
      %p387 = scmp.lt.s32.totalorder %s18, 3
      %p388 = pnand %p386, %p387
      %p389 = pneg %p388
      // Predicated region
      $region87: #{autoencoder_forward.1} parent=5 // pred_check
        _
      $region88: #{autoencoder_forward.1} parent=5 // pred_check_branch
        %391 = sbr.rel (%p388) target = $region90
      $region89: #{autoencoder_forward.1} parent=5 // pred_region
        %s392 = ssub.s32 %s18, 1
        %s393 = sand.u32 %s31, 1
        %s394 = sand.u32 %s31, 1
        %s395 = smul.addr %s394, 32
        %s396 = scalar_lea.vmem [#allocation2], %s395
        // Predicated region
        $region91: #{autoencoder_forward.1} parent=89 // pred_check
          %p397 = pneg %p44
        $region92: #{autoencoder_forward.1} parent=89 // pred_check_branch
          %399 = sbr.rel (%p397) target = $region94
        $region93: #{autoencoder_forward.1} parent=89 // pred_region
          _
        $region94: #{autoencoder_forward.1} parent=89 // pred_fallthru
          _
        %s400 = sand.u32 %s31, 1
        %s401 = sand.u32 %s31, 1
        %s402 = smul.addr %s401, 32
        %s403 = scalar_lea.vmem [#allocation2], %s402
        %p404 = pneg %p44
        %p405 = pneg %p41
        %p406 = pneg %p65
        %p407 = pneg %p62
        %p408 = pneg %p86
        %p409 = pneg %p83
        %p410 = pneg %p107
        %p411 = pneg %p104
        %p412 = pneg %p128
        %p413 = pneg %p125
        %p414 = pneg %p149
        %p415 = pneg %p146
        %p416 = pneg %p170
        %p417 = pneg %p167
        %p418 = pneg %p191
        %p419 = pneg %p188
        %p420 = pneg %p212
        %p421 = pneg %p209
        %p422 = pneg %p238
        %p423 = pneg %p235
        %s424 = sand.u32 %s225, 1
        %s425 = sand.u32 %s225, 1
        %s426 = smul.addr %s425, 32
        %s427 = scalar_lea.vmem [#allocation3], %s426
        %p428 = pneg %p264
        %p429 = pneg %p261
        %p430 = scmp.lt.s32.totalorder %s23, 1
        %s431 = scalar_select %p430, %s23, 1
        %s432 = smul.addr %s431, 8
        %s433 = scalar_lea.vmem %s10, %s432
        %p434 = pneg %p290
        %p435 = pneg %p287
        %p436 = scmp.lt.s32.totalorder %s23, 1
        %s437 = scalar_select %p436, %s23, 1
        %s438 = scalar_lea.vmem %s11, %s437
        %p439 = scmp.lt.s32.totalorder %s23, 1
        %s440 = scalar_select %p439, %s23, 1
        %s441 = smul.addr %s440, 8
        %s442 = scalar_lea.vmem %s10, %s441
        %p443 = scmp.lt.s32.totalorder %s23, 1
        %s444 = scalar_select %p443, %s23, 1
        %s445 = scalar_lea.vmem %s11, %s444
        %v446 = vld [vmem:[%s396] sm:$0xff]
        %v447 = vld [vmem:[%s396 + $0x8] sm:$0xff]
        %v448 = vld [vmem:[%s396 + $0x10] sm:$0xff]
        %v449 = vld [vmem:[%s396 + $0x18] sm:$0xff]
        %v450 = vld [vmem:[%s1] sm:$0xff]
        %v451 = vld [vmem:[%s1 + $0x8] sm:$0xff]
        %v452 = vld [vmem:[%s2] sm:$0xff]
        %v453 = vld [vmem:[%s2 + $0x8] sm:$0xff]
        %455 = vset.pattern.permute.xlu0 0
        %456 = vperm.xlu0 %455, %v452
        %v457 = vpop.permute.xlu0 %456
        %460 = vset.pattern.permute.xlu0 0
        %461 = vperm.xlu0 %460, %v453
        %v462 = vpop.permute.xlu0 %461
        %vm464 = vcmask 261120
        %v466 = vsel %vm464, %v450, 0
        %v469 = vsel %vm464, %v451, 0
        %471 = vmatprep.subr.mxu0 0.0
        %472 = vmatpush1.msra.mxu0 %v446
        %473 = vmatprep.subr.mxu0 0.0
        %474 = vmatpush1.msra.mxu0 %v447
        %475 = vmatprep.subr.mxu0 0.0
        %476 = vmatpush1.msra.mxu0 %v448
        %477 = vmatprep.subr.mxu0 0.0
        %478 = vmatpush1.msra.mxu0 %v449
        %479 = vmatprep.subr.mxu0 0.0
        %480 = vmatpush1.msra.mxu0 0.0
        %481 = vmatprep.subr.mxu0 0.0
        %482 = vmatpush1.msra.mxu0 0.0
        %483 = vmatprep.subr.mxu0 0.0
        %484 = vmatpush1.msra.mxu0 0.0
        %485 = vmatprep.subr.mxu0 0.0
        %486 = vmatpush1.msra.mxu0 0.0
        %487 = vmatprep.subr.mxu0 0.0
        %488 = vmatpush1.msra.mxu0 0.0
        %489 = vmatprep.subr.mxu0 0.0
        %490 = vmatpush1.msra.mxu0 0.0
        %491 = vmatprep.subr.mxu0 0.0
        %492 = vmatpush1.msra.mxu0 0.0
        %493 = vmatprep.subr.mxu0 0.0
        %494 = vmatpush1.msra.mxu0 0.0
        %495 = vmatprep.subr.mxu0 0.0
        %496 = vmatpush1.msra.mxu0 0.0
        %497 = vmatprep.subr.mxu0 0.0
        %498 = vmatpush1.msra.mxu0 0.0
        %499 = vmatprep.subr.mxu0 0.0
        %500 = vmatpush1.msra.mxu0 0.0
        %501 = vmatprep.subr.mxu0 0.0
        %502 = vmatpush1.msra.mxu0 0.0
        %503 = vmatprep.subr.mxu0 0.0
        %504 = vmatpush1.msra.mxu0 0.0
        %505 = vmatprep.subr.mxu0 0.0
        %506 = vmatpush1.msra.mxu0 0.0
        %507 = vmatprep.subr.mxu0 0.0
        %508 = vmatpush1.msra.mxu0 0.0
        %509 = vmatprep.subr.mxu0 0.0
        %510 = vmatpush1.msra.mxu0 0.0
        %511 = vmatprep.subr.mxu0 0.0
        %512 = vmatpush1.msra.mxu0 0.0
        %513 = vmatprep.subr.mxu0 0.0
        %514 = vmatpush1.msra.mxu0 0.0
        %515 = vmatprep.subr.mxu0 0.0
        %516 = vmatpush1.msra.mxu0 0.0
        %517 = vmatprep.subr.mxu0 0.0
        %518 = vmatpush1.msra.mxu0 0.0
        %519 = vmatprep.subr.mxu0 0.0
        %520 = vmatpush1.msra.mxu0 0.0
        %521 = vmatprep.subr.mxu0 0.0
        %522 = vmatpush1.msra.mxu0 0.0
        %523 = vmatprep.subr.mxu0 0.0
        %524 = vmatpush1.msra.mxu0 0.0
        %525 = vmatprep.subr.mxu0 0.0
        %526 = vmatpush1.msra.mxu0 0.0
        %527 = vmatprep.subr.mxu0 0.0
        %528 = vmatpush1.msra.mxu0 0.0
        %529 = vmatprep.subr.mxu0 0.0
        %530 = vmatpush1.msra.mxu0 0.0
        %531 = vmatprep.subr.mxu0 0.0
        %532 = vmatpush1.msra.mxu0 0.0
        %533 = vmatprep.subr.mxu0 0.0
        %534 = vmatpush1.msra.mxu0 0.0
        %535 = vmatprep.mubr.f32.mxu0 0.0
        %536 = vmatmul.mubr.f32.gmra.mrb[0].mxu0 %v466
        %v537 = vpop.f32.mrb[0].mxu0
        %v538 = vadd.f32 %v457, %v537
        %v539 = vpop.f32.mrb[0].mxu0
        %540 = vmatprep.mubr.f32.mxu0 0.0
        %541 = vmatmul.mubr.f32.gmra.mrb[0].mxu0 %v469
        %v542 = vpop.f32.mrb[0].mxu0
        %v543 = vadd.f32 %v462, %v542
        %v544 = vpop.f32.mrb[0].mxu0
        %545 = vdwg.mxu0
        %v546 = vmax.f32 %v538, 0.0
        %v547 = vmax.f32 %v543, 0.0
        %v548 = vld [vmem:[%s3] sm:$0xff]
        %v549 = vld [vmem:[%s4] sm:$0xff]
        %551 = vset.pattern.permute.xlu0 0
        %552 = vperm.xlu0 %551, %v549
        %v553 = vpop.permute.xlu0 %552
        %vm555 = vcmask 130048
        %v557 = vsel %vm555, %v548, 0
        %559 = vmatprep.subr.mxu0 0.0
        %560 = vmatpush1.msra.mxu0 %v546
        %561 = vmatprep.subr.mxu0 0.0
        %562 = vmatpush1.msra.mxu0 %v547
        %563 = vmatprep.subr.mxu0 0.0
        %564 = vmatpush1.msra.mxu0 0.0
        %565 = vmatprep.subr.mxu0 0.0
        %566 = vmatpush1.msra.mxu0 0.0
        %567 = vmatprep.subr.mxu0 0.0
        %568 = vmatpush1.msra.mxu0 0.0
        %569 = vmatprep.subr.mxu0 0.0
        %570 = vmatpush1.msra.mxu0 0.0
        %571 = vmatprep.subr.mxu0 0.0
        %572 = vmatpush1.msra.mxu0 0.0
        %573 = vmatprep.subr.mxu0 0.0
        %574 = vmatpush1.msra.mxu0 0.0
        %575 = vmatprep.subr.mxu0 0.0
        %576 = vmatpush1.msra.mxu0 0.0
        %577 = vmatprep.subr.mxu0 0.0
        %578 = vmatpush1.msra.mxu0 0.0
        %579 = vmatprep.subr.mxu0 0.0
        %580 = vmatpush1.msra.mxu0 0.0
        %581 = vmatprep.subr.mxu0 0.0
        %582 = vmatpush1.msra.mxu0 0.0
        %583 = vmatprep.subr.mxu0 0.0
        %584 = vmatpush1.msra.mxu0 0.0
        %585 = vmatprep.subr.mxu0 0.0
        %586 = vmatpush1.msra.mxu0 0.0
        %587 = vmatprep.subr.mxu0 0.0
        %588 = vmatpush1.msra.mxu0 0.0
        %589 = vmatprep.subr.mxu0 0.0
        %590 = vmatpush1.msra.mxu0 0.0
        %591 = vmatprep.subr.mxu0 0.0
        %592 = vmatpush1.msra.mxu0 0.0
        %593 = vmatprep.subr.mxu0 0.0
        %594 = vmatpush1.msra.mxu0 0.0
        %595 = vmatprep.subr.mxu0 0.0
        %596 = vmatpush1.msra.mxu0 0.0
        %597 = vmatprep.subr.mxu0 0.0
        %598 = vmatpush1.msra.mxu0 0.0
        %599 = vmatprep.subr.mxu0 0.0
        %600 = vmatpush1.msra.mxu0 0.0
        %601 = vmatprep.subr.mxu0 0.0
        %602 = vmatpush1.msra.mxu0 0.0
        %603 = vmatprep.subr.mxu0 0.0
        %604 = vmatpush1.msra.mxu0 0.0
        %605 = vmatprep.subr.mxu0 0.0
        %606 = vmatpush1.msra.mxu0 0.0
        %607 = vmatprep.subr.mxu0 0.0
        %608 = vmatpush1.msra.mxu0 0.0
        %609 = vmatprep.subr.mxu0 0.0
        %610 = vmatpush1.msra.mxu0 0.0
        %611 = vmatprep.subr.mxu0 0.0
        %612 = vmatpush1.msra.mxu0 0.0
        %613 = vmatprep.subr.mxu0 0.0
        %614 = vmatpush1.msra.mxu0 0.0
        %615 = vmatprep.subr.mxu0 0.0
        %616 = vmatpush1.msra.mxu0 0.0
        %617 = vmatprep.subr.mxu0 0.0
        %618 = vmatpush1.msra.mxu0 0.0
        %619 = vmatprep.subr.mxu0 0.0
        %620 = vmatpush1.msra.mxu0 0.0
        %621 = vmatprep.subr.mxu0 0.0
        %622 = vmatpush1.msra.mxu0 0.0
        %623 = vmatprep.mubr.f32.mxu0 0.0
        %624 = vmatmul.mubr.f32.gmra.mrb[0].mxu0 %v557
        %v625 = vpop.f32.mrb[0].mxu0
        %v626 = vadd.f32 %v553, %v625
        %v627 = vpop.f32.mrb[0].mxu0
        %628 = vdwg.mxu0
        %v629 = vmax.f32 %v626, 0.0
        %630 = vst [vmem:[%s442] sm:$0xff] %v629
        %v631 = vld [vmem:[%s5] sm:$0xff]
        %v632 = vld [vmem:[%s5 + $0x8] sm:$0xff]
        %v633 = vld [vmem:[%s6] sm:$0xff]
        %v634 = vld [vmem:[%s6 + $0x8] sm:$0xff]
        %636 = vset.pattern.permute.xlu0 0
        %637 = vperm.xlu0 %636, %v633
        %v638 = vpop.permute.xlu0 %637
        %641 = vset.pattern.permute.xlu0 0
        %642 = vperm.xlu0 %641, %v634
        %v643 = vpop.permute.xlu0 %642
        %vm645 = vcmask 64512
        %v647 = vsel %vm645, %v631, 0
        %v650 = vsel %vm645, %v632, 0
        %652 = vmatprep.subr.mxu0 0.0
        %653 = vmatpush1.msra.mxu0 %v629
        %654 = vmatprep.subr.mxu0 0.0
        %655 = vmatpush1.msra.mxu0 0.0
        %656 = vmatprep.subr.mxu0 0.0
        %657 = vmatpush1.msra.mxu0 0.0
        %658 = vmatprep.subr.mxu0 0.0
        %659 = vmatpush1.msra.mxu0 0.0
        %660 = vmatprep.subr.mxu0 0.0
        %661 = vmatpush1.msra.mxu0 0.0
        %662 = vmatprep.subr.mxu0 0.0
        %663 = vmatpush1.msra.mxu0 0.0
        %664 = vmatprep.subr.mxu0 0.0
        %665 = vmatpush1.msra.mxu0 0.0
        %666 = vmatprep.subr.mxu0 0.0
        %667 = vmatpush1.msra.mxu0 0.0
        %668 = vmatprep.subr.mxu0 0.0
        %669 = vmatpush1.msra.mxu0 0.0
        %670 = vmatprep.subr.mxu0 0.0
        %671 = vmatpush1.msra.mxu0 0.0
        %672 = vmatprep.subr.mxu0 0.0
        %673 = vmatpush1.msra.mxu0 0.0
        %674 = vmatprep.subr.mxu0 0.0
        %675 = vmatpush1.msra.mxu0 0.0
        %676 = vmatprep.subr.mxu0 0.0
        %677 = vmatpush1.msra.mxu0 0.0
        %678 = vmatprep.subr.mxu0 0.0
        %679 = vmatpush1.msra.mxu0 0.0
        %680 = vmatprep.subr.mxu0 0.0
        %681 = vmatpush1.msra.mxu0 0.0
        %682 = vmatprep.subr.mxu0 0.0
        %683 = vmatpush1.msra.mxu0 0.0
        %684 = vmatprep.subr.mxu0 0.0
        %685 = vmatpush1.msra.mxu0 0.0
        %686 = vmatprep.subr.mxu0 0.0
        %687 = vmatpush1.msra.mxu0 0.0
        %688 = vmatprep.subr.mxu0 0.0
        %689 = vmatpush1.msra.mxu0 0.0
        %690 = vmatprep.subr.mxu0 0.0
        %691 = vmatpush1.msra.mxu0 0.0
        %692 = vmatprep.subr.mxu0 0.0
        %693 = vmatpush1.msra.mxu0 0.0
        %694 = vmatprep.subr.mxu0 0.0
        %695 = vmatpush1.msra.mxu0 0.0
        %696 = vmatprep.subr.mxu0 0.0
        %697 = vmatpush1.msra.mxu0 0.0
        %698 = vmatprep.subr.mxu0 0.0
        %699 = vmatpush1.msra.mxu0 0.0
        %700 = vmatprep.subr.mxu0 0.0
        %701 = vmatpush1.msra.mxu0 0.0
        %702 = vmatprep.subr.mxu0 0.0
        %703 = vmatpush1.msra.mxu0 0.0
        %704 = vmatprep.subr.mxu0 0.0
        %705 = vmatpush1.msra.mxu0 0.0
        %706 = vmatprep.subr.mxu0 0.0
        %707 = vmatpush1.msra.mxu0 0.0
        %708 = vmatprep.subr.mxu0 0.0
        %709 = vmatpush1.msra.mxu0 0.0
        %710 = vmatprep.subr.mxu0 0.0
        %711 = vmatpush1.msra.mxu0 0.0
        %712 = vmatprep.subr.mxu0 0.0
        %713 = vmatpush1.msra.mxu0 0.0
        %714 = vmatprep.subr.mxu0 0.0
        %715 = vmatpush1.msra.mxu0 0.0
        %716 = vmatprep.mubr.f32.mxu0 0.0
        %717 = vmatmul.mubr.f32.gmra.mrb[0].mxu0 %v647
        %v718 = vpop.f32.mrb[0].mxu0
        %v719 = vadd.f32 %v638, %v718
        %v720 = vpop.f32.mrb[0].mxu0
        %721 = vmatprep.mubr.f32.mxu0 0.0
        %722 = vmatmul.mubr.f32.gmra.mrb[0].mxu0 %v650
        %v723 = vpop.f32.mrb[0].mxu0
        %v724 = vadd.f32 %v643, %v723
        %v725 = vpop.f32.mrb[0].mxu0
        %726 = vdwg.mxu0
        %v727 = vmax.f32 %v719, 0.0
        %v728 = vmax.f32 %v724, 0.0
        %v729 = vld [vmem:[%s7] sm:$0xff]
        %v730 = vld [vmem:[%s7 + $0x8] sm:$0xff]
        %v731 = vld [vmem:[%s7 + $0x10] sm:$0xff]
        %v732 = vld [vmem:[%s7 + $0x18] sm:$0xff]
        %v733 = vld [vmem:[%s8] sm:$0xff]
        %v734 = vld [vmem:[%s8 + $0x8] sm:$0xff]
        %v735 = vld [vmem:[%s8 + $0x10] sm:$0xff]
        %v736 = vld [vmem:[%s8 + $0x18] sm:$0xff]
        %738 = vset.pattern.permute.xlu0 0
        %739 = vperm.xlu0 %738, %v733
        %v740 = vpop.permute.xlu0 %739
        %743 = vset.pattern.permute.xlu0 0
        %744 = vperm.xlu0 %743, %v734
        %v745 = vpop.permute.xlu0 %744
        %748 = vset.pattern.permute.xlu0 0
        %749 = vperm.xlu0 %748, %v735
        %v750 = vpop.permute.xlu0 %749
        %753 = vset.pattern.permute.xlu0 0
        %754 = vperm.xlu0 %753, %v736
        %v755 = vpop.permute.xlu0 %754
        %v758 = vsel %vm555, %v729, 0
        %v761 = vsel %vm555, %v730, 0
        %v764 = vsel %vm555, %v731, 0
        %v767 = vsel %vm555, %v732, 0
        %769 = vmatprep.subr.mxu0 0.0
        %770 = vmatpush1.msra.mxu0 %v727
        %771 = vmatprep.subr.mxu0 0.0
        %772 = vmatpush1.msra.mxu0 %v728
        %773 = vmatprep.subr.mxu0 0.0
        %774 = vmatpush1.msra.mxu0 0.0
        %775 = vmatprep.subr.mxu0 0.0
        %776 = vmatpush1.msra.mxu0 0.0
        %777 = vmatprep.subr.mxu0 0.0
        %778 = vmatpush1.msra.mxu0 0.0
        %779 = vmatprep.subr.mxu0 0.0
        %780 = vmatpush1.msra.mxu0 0.0
        %781 = vmatprep.subr.mxu0 0.0
        %782 = vmatpush1.msra.mxu0 0.0
        %783 = vmatprep.subr.mxu0 0.0
        %784 = vmatpush1.msra.mxu0 0.0
        %785 = vmatprep.subr.mxu0 0.0
        %786 = vmatpush1.msra.mxu0 0.0
        %787 = vmatprep.subr.mxu0 0.0
        %788 = vmatpush1.msra.mxu0 0.0
        %789 = vmatprep.subr.mxu0 0.0
        %790 = vmatpush1.msra.mxu0 0.0
        %791 = vmatprep.subr.mxu0 0.0
        %792 = vmatpush1.msra.mxu0 0.0
        %793 = vmatprep.subr.mxu0 0.0
        %794 = vmatpush1.msra.mxu0 0.0
        %795 = vmatprep.subr.mxu0 0.0
        %796 = vmatpush1.msra.mxu0 0.0
        %797 = vmatprep.subr.mxu0 0.0
        %798 = vmatpush1.msra.mxu0 0.0
        %799 = vmatprep.subr.mxu0 0.0
        %800 = vmatpush1.msra.mxu0 0.0
        %801 = vmatprep.subr.mxu0 0.0
        %802 = vmatpush1.msra.mxu0 0.0
        %803 = vmatprep.subr.mxu0 0.0
        %804 = vmatpush1.msra.mxu0 0.0
        %805 = vmatprep.subr.mxu0 0.0
        %806 = vmatpush1.msra.mxu0 0.0
        %807 = vmatprep.subr.mxu0 0.0
        %808 = vmatpush1.msra.mxu0 0.0
        %809 = vmatprep.subr.mxu0 0.0
        %810 = vmatpush1.msra.mxu0 0.0
        %811 = vmatprep.subr.mxu0 0.0
        %812 = vmatpush1.msra.mxu0 0.0
        %813 = vmatprep.subr.mxu0 0.0
        %814 = vmatpush1.msra.mxu0 0.0
        %815 = vmatprep.subr.mxu0 0.0
        %816 = vmatpush1.msra.mxu0 0.0
        %817 = vmatprep.subr.mxu0 0.0
        %818 = vmatpush1.msra.mxu0 0.0
        %819 = vmatprep.subr.mxu0 0.0
        %820 = vmatpush1.msra.mxu0 0.0
        %821 = vmatprep.subr.mxu0 0.0
        %822 = vmatpush1.msra.mxu0 0.0
        %823 = vmatprep.subr.mxu0 0.0
        %824 = vmatpush1.msra.mxu0 0.0
        %825 = vmatprep.subr.mxu0 0.0
        %826 = vmatpush1.msra.mxu0 0.0
        %827 = vmatprep.subr.mxu0 0.0
        %828 = vmatpush1.msra.mxu0 0.0
        %829 = vmatprep.subr.mxu0 0.0
        %830 = vmatpush1.msra.mxu0 0.0
        %831 = vmatprep.subr.mxu0 0.0
        %832 = vmatpush1.msra.mxu0 0.0
        %833 = vmatprep.mubr.f32.mxu0 0.0
        %834 = vmatmul.mubr.f32.gmra.mrb[0].mxu0 %v758
        %v835 = vpop.f32.mrb[0].mxu0
        %v836 = vadd.f32 %v740, %v835
        %v837 = vpop.f32.mrb[0].mxu0
        %838 = vmatprep.mubr.f32.mxu0 0.0
        %839 = vmatmul.mubr.f32.gmra.mrb[0].mxu0 %v761
        %v840 = vpop.f32.mrb[0].mxu0
        %v841 = vadd.f32 %v745, %v840
        %v842 = vpop.f32.mrb[0].mxu0
        %843 = vmatprep.mubr.f32.mxu0 0.0
        %844 = vmatmul.mubr.f32.gmra.mrb[0].mxu0 %v764
        %v845 = vpop.f32.mrb[0].mxu0
        %v846 = vadd.f32 %v750, %v845
        %v847 = vpop.f32.mrb[0].mxu0
        %848 = vmatprep.mubr.f32.mxu0 0.0
        %849 = vmatmul.mubr.f32.gmra.mrb[0].mxu0 %v767
        %v850 = vpop.f32.mrb[0].mxu0
        %v851 = vadd.f32 %v755, %v850
        %v852 = vpop.f32.mrb[0].mxu0
        %853 = vdwg.mxu0
        %v854 = vmax.f32 %v836, 0.0
        %v855 = vmax.f32 %v841, 0.0
        %v856 = vmax.f32 %v846, 0.0
        %v857 = vmax.f32 %v851, 0.0
        %858 = vst [vmem:[%s427] sm:$0xff] %v854
        %859 = vst [vmem:[%s427 + $0x8] sm:$0xff] %v855
        %860 = vst [vmem:[%s427 + $0x10] sm:$0xff] %v856
        %861 = vst [vmem:[%s427 + $0x18] sm:$0xff] %v857
        %v862 = vsub.f32 %v854, %v446
        %v863 = vsub.f32 %v855, %v447
        %v864 = vsub.f32 %v856, %v448
        %v865 = vsub.f32 %v857, %v449
        %v866 = vlaneseq
        %v867 = vand.u32 %v866, 127
        %s868 = smul.u32 %s23, 128
        %v869 = vstv %s868
        %v870 = vadd.s32 %v867, %v869
        %vm871 = vcmp.lt.s32.totalorder %v870, 200
        %v872 = vsel %vm871, 1, 0
        %vm873 = vcmp.eq.s32.totalorder %v872, 1
        %v874 = vsel %vm873, %v862, 0.0
        %v875 = vsel %vm873, %v863, 0.0
        %v876 = vsel %vm873, %v864, 0.0
        %v877 = vsel %vm873, %v865, 0.0
        %v878 = vmul.f32 %v874, %v874
        %v879 = vmul.f32 %v875, %v875
        %v880 = vmul.f32 %v876, %v876
        %v881 = vmul.f32 %v877, %v877
        %v882 = vadd.f32 %v878, %v879
        %v883 = vadd.f32 %v882, %v880
        %v884 = vadd.f32 %v883, %v881
        %v885 = vrot.slane %v884, 4
        %v886 = vadd.f32 %v884, %v885
        %v887 = vrot.slane %v886, 2
        %v888 = vadd.f32 %v886, %v887
        %v889 = vrot.slane %v888, 1
        %v890 = vadd.f32 %v888, %v889
        %891 = vst [vmem:[%s445] sm:$0x1] %v890
        %s892 = sand.u32 %s225, 1
        %s893 = sand.u32 %s225, 1
        %s894 = smul.addr %s893, 32
        %s895 = scalar_lea.vmem [#allocation3], %s894
        %p896 = scmp.lt.s32.totalorder %s23, 1
        %s897 = scalar_select %p896, %s23, 1
        %s898 = smul.addr %s897, 8
        %s899 = scalar_lea.vmem %s10, %s898
        %p900 = scmp.lt.s32.totalorder %s23, 1
        %s901 = scalar_select %p900, %s23, 1
        %s902 = scalar_lea.vmem %s11, %s901
        // Predicated region
        $region95: #{autoencoder_forward.1} parent=89 // pred_check
          %p903 = pneg %p235
        $region96: #{autoencoder_forward.1} parent=89 // pred_check_branch
          %905 = sbr.rel (%p903) target = $region98
        $region97: #{autoencoder_forward.1} parent=89 // pred_region
          %s906 = smul.addr %s23, 8
          %s907 = scalar_lea.vmem %s9, %s906
          // Predicated region
          $region99: #{autoencoder_forward.1} parent=97 // pred_check
            _
          $region100: #{autoencoder_forward.1} parent=97 // pred_check_branch
            %909 = sbr.rel (0) target = $region102
          $region101: #{autoencoder_forward.1} parent=97 // pred_region
            // Predicated region
            $region103: #{autoencoder_forward.1} parent=101 // pred_check
              _
            $region104: #{autoencoder_forward.1} parent=101 // pred_check_branch
              %911 = sbr.rel (0) target = $region106
            $region105: #{autoencoder_forward.1} parent=101 // pred_region
              // Predicated region
              $region118: #{autoencoder_forward.1} parent=105 // pred_check
                _
              $region119: #{autoencoder_forward.1} parent=105 // pred_check_branch
                %932 = sbr.rel (0) target = $region121
              $region120: #{autoencoder_forward.1} parent=105 // pred_region
                loop: start=0, step=1, limit=1
                $region122: #{autoencoder_forward.1} parent=120 // loop_pre_header
                  _
                $region123: #{autoencoder_forward.1} parent=120 // loop_header
                  %s934 = sphi 0, %s938
                  %p935 = scmp.ge.s32.totalorder %s934, 1
                  %s939 = sphi %s895, %s895
                  %s940 = sphi %s907, %s907
                $region124: #{autoencoder_forward.1} parent=120 // loop_header_branch
                  %937 = sbr.rel (%p935) target = $region128
                $region125: #{autoencoder_forward.1} parent=120 // loop_body
                  %v941 = vld [vmem:[%s939] sm:$0xff]
                  %942 = vst [vmem:[%s940] sm:$0xff] %v941
                  %v943 = vld [vmem:[%s939 + $0x8] sm:$0xff]
                  %944 = vst [vmem:[%s940 + $0x10] sm:$0xff] %v943
                  %v945 = vld [vmem:[%s939 + $0x10] sm:$0xff]
                  %946 = vst [vmem:[%s940 + $0x20] sm:$0xff] %v945
                  %v947 = vld [vmem:[%s939 + $0x18] sm:$0xff]
                  %948 = vst [vmem:[%s940 + $0x30] sm:$0xff] %v947
                $region126: #{autoencoder_forward.1} parent=120 // loop_footer
                  %s938 = sadd.s32 1, %s934
                $region127: #{autoencoder_forward.1} parent=120 // loop_footer_branch
                  %933 = sbr.rel target = $region123
                $region128: #{autoencoder_forward.1} parent=120 // loop_exit
                  _
              $region121: #{autoencoder_forward.1} parent=105 // pred_fallthru
                _
              // Predicated region
              $region129: #{autoencoder_forward.1} parent=105 // pred_check
                _
              $region130: #{autoencoder_forward.1} parent=105 // pred_check_branch
                %950 = sbr.rel target = $region132
              $region131: #{autoencoder_forward.1} parent=105 // pred_region
                _
              $region132: #{autoencoder_forward.1} parent=105 // pred_fallthru
                _
            $region106: #{autoencoder_forward.1} parent=101 // pred_fallthru
              _
            // Predicated region
            $region107: #{autoencoder_forward.1} parent=101 // pred_check
              _
            $region108: #{autoencoder_forward.1} parent=101 // pred_check_branch
              %913 = sbr.rel target = $region110
            $region109: #{autoencoder_forward.1} parent=101 // pred_region
              loop: start=0, step=1, limit=1
              $region111: #{autoencoder_forward.1} parent=109 // loop_pre_header
                _
              $region112: #{autoencoder_forward.1} parent=109 // loop_header
                %s916 = sphi 0, %s920
                %p917 = scmp.ge.s32.totalorder %s916, 1
                %s921 = sphi %s895, %s895
                %s922 = sphi %s907, %s907
              $region113: #{autoencoder_forward.1} parent=109 // loop_header_branch
                %919 = sbr.rel (%p917) target = $region117
              $region114: #{autoencoder_forward.1} parent=109 // loop_body
                %v923 = vld [vmem:[%s921] sm:$0xff]
                %924 = vst [vmem:[%s922] sm:$0xff] %v923
                %v925 = vld [vmem:[%s921 + $0x8] sm:$0xff]
                %926 = vst [vmem:[%s922 + $0x10] sm:$0xff] %v925
                %v927 = vld [vmem:[%s921 + $0x10] sm:$0xff]
                %928 = vst [vmem:[%s922 + $0x20] sm:$0xff] %v927
                %v929 = vld [vmem:[%s921 + $0x18] sm:$0xff]
                %930 = vst [vmem:[%s922 + $0x30] sm:$0xff] %v929
              $region115: #{autoencoder_forward.1} parent=109 // loop_footer
                %s920 = sadd.s32 1, %s916
              $region116: #{autoencoder_forward.1} parent=109 // loop_footer_branch
                %915 = sbr.rel target = $region112
              $region117: #{autoencoder_forward.1} parent=109 // loop_exit
                _
            $region110: #{autoencoder_forward.1} parent=101 // pred_fallthru
              _
          $region102: #{autoencoder_forward.1} parent=97 // pred_fallthru
            _
          %951 = vnop
        $region98: #{autoencoder_forward.1} parent=89 // pred_fallthru
          _
        // Predicated region
        $region133: #{autoencoder_forward.1} parent=89 // pred_check
          %p952 = pneg %p261
        $region134: #{autoencoder_forward.1} parent=89 // pred_check_branch
          %954 = sbr.rel (%p952) target = $region136
        $region135: #{autoencoder_forward.1} parent=89 // pred_region
          _
        $region136: #{autoencoder_forward.1} parent=89 // pred_fallthru
          _
        // Predicated region
        $region137: #{autoencoder_forward.1} parent=89 // pred_check
          %p955 = pneg %p287
        $region138: #{autoencoder_forward.1} parent=89 // pred_check_branch
          %957 = sbr.rel (%p955) target = $region140
        $region139: #{autoencoder_forward.1} parent=89 // pred_region
          _
        $region140: #{autoencoder_forward.1} parent=89 // pred_fallthru
          _
      $region90: #{autoencoder_forward.1} parent=5 // pred_fallthru
        _
      %p958 = scmp.le.s32.totalorder 2, %s18
      // Predicated region
      $region141: #{autoencoder_forward.1} parent=5 // pred_check
        %p959 = pneg %p958
      $region142: #{autoencoder_forward.1} parent=5 // pred_check_branch
        %961 = sbr.rel (%p959) target = $region144
      $region143: #{autoencoder_forward.1} parent=5 // pred_region
        %s962 = ssub.s32 %s18, 2
        // Predicated region
        $region145: #{autoencoder_forward.1} parent=143 // pred_check
          %p963 = pneg %p241
        $region146: #{autoencoder_forward.1} parent=143 // pred_check_branch
          %965 = sbr.rel (%p963) target = $region148
        $region147: #{autoencoder_forward.1} parent=143 // pred_region
          %s966 = sand.u32 %s226, 1
          %s967 = sand.u32 %s226, 1
          %s968 = smul.addr %s967, 32
          %s969 = scalar_lea.vmem [#allocation3], %s968
        $region148: #{autoencoder_forward.1} parent=143 // pred_fallthru
          _
        // Predicated region
        $region149: #{autoencoder_forward.1} parent=143 // pred_check
          %p970 = pneg %p267
        $region150: #{autoencoder_forward.1} parent=143 // pred_check_branch
          %972 = sbr.rel (%p970) target = $region152
        $region151: #{autoencoder_forward.1} parent=143 // pred_region
          %p973 = scmp.lt.s32.totalorder %s24, 1
          %s974 = scalar_select %p973, %s24, 1
          %s975 = smul.addr %s974, 8
          %s976 = scalar_lea.vmem %s10, %s975
        $region152: #{autoencoder_forward.1} parent=143 // pred_fallthru
          _
        // Predicated region
        $region153: #{autoencoder_forward.1} parent=143 // pred_check
          %p977 = pneg %p293
        $region154: #{autoencoder_forward.1} parent=143 // pred_check_branch
          %979 = sbr.rel (%p977) target = $region156
        $region155: #{autoencoder_forward.1} parent=143 // pred_region
          %p980 = scmp.lt.s32.totalorder %s24, 1
          %s981 = scalar_select %p980, %s24, 1
          %s982 = scalar_lea.vmem %s11, %s981
        $region156: #{autoencoder_forward.1} parent=143 // pred_fallthru
          _
      $region144: #{autoencoder_forward.1} parent=5 // pred_fallthru
        _
    $region6: #{autoencoder_forward.1} parent=1 // loop_footer
      %s22 = sadd.s32 1, %s18
    $region7: #{autoencoder_forward.1} parent=1 // loop_footer_branch
      %17 = sbr.rel target = $region3
    $region8: #{autoencoder_forward.1} parent=1 // loop_exit
      _

</llo_original>
